<compile_context>
chip_gen: v7x
topology: tpu7x:2x2x1
jax: 0.10.0
libtpu: 0.0.40
codegen_flags: <defaults>
</compile_context>

<pallas_src>
import jax
import jax.numpy as jnp
from jax.experimental import pallas as pl
from jax.experimental.pallas import tpu as pltpu

LANE = 128
SUBLANE = 8
R_BLK = 128          # row-tile quantum: keeps the in-kernel transpose fully (8,128)-tiled
NEG_BIG = -1e30      # pad-logit bias: exp(NEG_BIG - m) underflows to exactly 0 in f32


def _round_up(x, m):
    return ((x + m - 1) // m) * m


def _cdiv(a, b):
    return (a + b - 1) // b


def matcher_kernel(tab_ref, w1t_ref, b1_ref, w2_ref, b2_ref, o_ref):
    # Per grid step:
    #   tab_ref : (TR, T)      f32   row tile of table embeddings (pipelined HBM->VMEM)
    #   w1t_ref : (T, H)       bf16  fc_1 weight rows for the table features (resident)
    #   b1_ref  : (1, H)       f32   fc_1 bias + folded utterance contribution (resident)
    #   w2_ref  : (H, O_pad)   bf16  fc_2 weight, zero-padded columns (resident)
    #   b2_ref  : (1, O_pad)   f32   fc_2 bias, padded entries = NEG_BIG (resident)
    #   o_ref   : (O_SUB, TR)  f32   transposed, packed log-softmax output block

    # fc_1 on the MXU (bf16 operands, f32 accumulation); bias + ReLU in f32 on the VPU.
    tab = tab_ref[...].astype(w1t_ref.dtype)          # cheap in-kernel cast; compute has slack
    h = jnp.dot(tab, w1t_ref[...], preferred_element_type=jnp.float32)
    h = jnp.maximum(h + b1_ref[...], 0.0)

    # fc_2 over the lane-dense padded logit width (padded cols: W2=0, b2=NEG_BIG).
    logits = jnp.dot(h.astype(w2_ref.dtype), w2_ref[...],
                     preferred_element_type=jnp.float32) + b2_ref[...]

    # log_softmax along lanes (numerically stable); padded columns contribute exp() == 0.
    m = jnp.max(logits, axis=1, keepdims=True)
    lse = m + jnp.log(jnp.sum(jnp.exp(logits - m), axis=1, keepdims=True))
    ls = logits - lse                                  # (TR, O_pad) f32

    # Pack the writeback: transpose on the (idle) XLU, keep only the first O_SUB sublane
    # rows -> ~16x less HBM write than storing the full (TR, 128) f32 block.
    ls_t = ls.T                                        # (O_pad, TR), both dims % 128 == 0
    o_ref[...] = ls_t[: o_ref.shape[0], :]


def matcher_forward(utterance_vector, table_vector, w1, b1, w2, b2, *, row_tile=1024):
    """utterance_vector: (U,) or (1,U); table_vector: (num_header, T);
    w1: (U+T, hidden); b1: (hidden,); w2: (hidden, output); b2: (output,).
    Returns (num_header, output) f32 log-probs."""
    utt = jnp.reshape(utterance_vector, (-1,)).astype(jnp.float32)
    U = utt.shape[0]
    num_header, T = table_vector.shape
    hidden = w1.shape[1]
    output = w2.shape[1]

    O_pad = _round_up(output, LANE)      # lane-dense logits inside the kernel
    O_SUB = _round_up(output, SUBLANE)   # sublane rows actually written back to HBM

    # Row tile: multiple of 128; aim for >=4 grid steps (v7x megacore) but cap at row_tile
    # (v5e/v6e single-TC roofline). Partial last block rows are undefined and sliced off;
    # there is no cross-row reduction, so this is safe.
    TR = min(row_tile, max(R_BLK, _round_up(_cdiv(num_header, 4), R_BLK)))
    n_blk = _cdiv(num_header, TR)

    # Fold the grid-invariant utterance contribution into fc_1's bias (exact f32, runs once).
    w1_f32 = w1.astype(jnp.float32)
    b1_eff = (b1.astype(jnp.float32) + utt @ w1_f32[:U]).reshape(1, hidden)

    # Small weights straight to bf16 MXU operands; no padded f32 intermediates; the big
    # table operand is passed through untouched (cast to bf16 happens inside the kernel).
    w1t = w1[U:].astype(jnp.bfloat16)                                   # (T, hidden)
    w2_p = (jnp.zeros((hidden, O_pad), jnp.bfloat16)
            .at[:, :output].set(w2.astype(jnp.bfloat16)))
    b2_p = (jnp.full((1, O_pad), NEG_BIG, jnp.float32)
            .at[0, :output].set(b2.astype(jnp.float32)))

    const = lambda i: (0, 0)
    out_t = pl.pallas_call(
        matcher_kernel,
        out_shape=jax.ShapeDtypeStruct((O_SUB, n_blk * TR), jnp.float32),
        grid=(n_blk,),
        in_specs=[
            pl.BlockSpec((TR, T), lambda i: (i, 0)),   # table rows (pipelined, unpadded)
            pl.BlockSpec((T, hidden), const),          # W1 table part (VMEM-resident)
            pl.BlockSpec((1, hidden), const),          # b1 + utt @ W1_u (resident)
            pl.BlockSpec((hidden, O_pad), const),      # W2 (resident, zero-padded cols)
            pl.BlockSpec((1, O_pad), const),           # b2 (padded entries = NEG_BIG)
        ],
        out_specs=pl.BlockSpec((O_SUB, TR), lambda i: (0, i)),
        compiler_params=pltpu.CompilerParams(dimension_semantics=("parallel",)),
    )(table_vector, w1t, b1_eff, w2_p, b2_p)

    # (O_SUB, n_blk*TR) -> (num_header, output): tiny slice + transpose outside the kernel.
    return out_t[:output, :num_header].T


def init_params(key, input_size, hidden_size, output_size):
    """Deterministic init matching nn.Linear's default (uniform +- 1/sqrt(fan_in))."""
    k1, k2, k3, k4 = jax.random.split(key, 4)
    bound1 = 1.0 / (input_size ** 0.5)
    bound2 = 1.0 / (hidden_size ** 0.5)
    w1 = jax.random.uniform(k1, (input_size, hidden_size), jnp.float32, -bound1, bound1)
    b1 = jax.random.uniform(k2, (hidden_size,), jnp.float32, -bound1, bound1)
    w2 = jax.random.uniform(k3, (hidden_size, output_size), jnp.float32, -bound2, bound2)
    b2 = jax.random.uniform(k4, (output_size,), jnp.float32, -bound2, bound2)
    return w1, b1, w2, b2


if __name__ == "__main__":
    # Small, module-consistent shapes:
    #   utterance dim U = 16, table-embedding dim T = 16 -> input_size = 32
    #   hidden_size = 32, output_size = 2, num_header = 8 tables
    U, T = 16, 16
    input_size = U + T
    hidden_size = 32
    output_size = 2
    num_header = 8

    key = jax.random.PRNGKey(0)
    k_utt, k_tab, k_param = jax.random.split(key, 3)

    utterance_vector = jax.random.normal(k_utt, (U,), jnp.float32)
    table_vector = jax.random.normal(k_tab, (num_header, T), jnp.float32)
    w1, b1, w2, b2 = init_params(k_param, input_size, hidden_size, output_size)

    out = matcher_forward(utterance_vector, table_vector, w1, b1, w2, b2)
    out = jax.block_until_ready(out)

    # Pure-JAX reference with the same numerics the kernel uses (bf16 MXU operands,
    # f32 accumulation/elementwise, utterance term folded into the bias in exact f32).
    def to_bf(x):
        return x.astype(jnp.bfloat16).astype(jnp.float32)

    b1_eff_ref = b1 + utterance_vector @ w1[:U]
    h_ref = jnp.maximum(to_bf(table_vector) @ to_bf(w1[U:]) + b1_eff_ref, 0.0)
    logits_ref = to_bf(h_ref) @ to_bf(w2) + b2
    ref = jax.nn.log_softmax(logits_ref, axis=1)

    assert out.shape == (num_header, output_size)
    assert jnp.allclose(out, ref, atol=2e-3, rtol=2e-3), (
        float(jnp.max(jnp.abs(out - ref))))

    print("KERNEL_OK")
</pallas_src>

<mosaic_0001>
module attributes {stable_mosaic.version = 11 : i64} {
  func.func @matcher_kernel(%arg0: i32, %arg1: memref<128x16xf32, #tpu.memory_space<vmem>>, %arg2: memref<16x32xbf16, #tpu.memory_space<vmem>>, %arg3: memref<1x32xf32, #tpu.memory_space<vmem>>, %arg4: memref<32x128xbf16, #tpu.memory_space<vmem>>, %arg5: memref<1x128xf32, #tpu.memory_space<vmem>>, %arg6: memref<8x128xf32, #tpu.memory_space<vmem>>) attributes {dimension_semantics = [#tpu.dimension_semantics<parallel>], iteration_bounds = array<i64: 1>, scalar_prefetch = 0 : i64, scratch_operands = 0 : i64, tpu.core_type = #tpu.core_type<tc>, window_params = [{transform_indices = @transform_0, window_bounds = array<i64: 128, 16>}, {pipeline_mode = #tpu.pipeline_mode<synchronous>, transform_indices = @transform_1, window_bounds = array<i64: 16, 32>}, {pipeline_mode = #tpu.pipeline_mode<synchronous>, transform_indices = @transform_2, window_bounds = array<i64: 1, 32>}, {pipeline_mode = #tpu.pipeline_mode<synchronous>, transform_indices = @transform_3, window_bounds = array<i64: 32, 128>}, {pipeline_mode = #tpu.pipeline_mode<synchronous>, transform_indices = @transform_4, window_bounds = array<i64: 1, 128>}, {transform_indices = @transform_5, window_bounds = array<i64: 8, 128>}]} {
    %c0 = arith.constant 0 : index
    %c0_0 = arith.constant 0 : index
    %0 = vector.load %arg1[%c0, %c0_0] : memref<128x16xf32, #tpu.memory_space<vmem>>, vector<128x16xf32>
    %1 = arith.truncf %0 : vector<128x16xf32> to vector<128x16xbf16>
    %c0_1 = arith.constant 0 : index
    %c0_2 = arith.constant 0 : index
    %2 = vector.load %arg2[%c0_1, %c0_2] : memref<16x32xbf16, #tpu.memory_space<vmem>>, vector<16x32xbf16>
    %cst = arith.constant dense<0.000000e+00> : vector<128x32xf32>
    %3 = tpu.matmul %1, %2, %cst {dimension_numbers = #tpu.dot_dimension_numbers<[1], [0], [0], [1], [0, 0, 1, 1], [], []>} : vector<128x16xbf16>, vector<16x32xbf16>, vector<128x32xf32> -> vector<128x32xf32>
    %c0_3 = arith.constant 0 : index
    %c0_4 = arith.constant 0 : index
    %4 = vector.load %arg3[%c0_3, %c0_4] : memref<1x32xf32, #tpu.memory_space<vmem>>, vector<1x32xf32>
    %5 = vector.broadcast %4 : vector<1x32xf32> to vector<128x32xf32>
    %6 = arith.addf %3, %5 : vector<128x32xf32>
    %cst_5 = arith.constant 0.000000e+00 : f32
    %7 = vector.broadcast %cst_5 : f32 to vector<128x32xf32>
    %8 = arith.maximumf %6, %7 : vector<128x32xf32>
    %9 = arith.truncf %8 : vector<128x32xf32> to vector<128x32xbf16>
    %c0_6 = arith.constant 0 : index
    %c0_7 = arith.constant 0 : index
    %10 = vector.load %arg4[%c0_6, %c0_7] : memref<32x128xbf16, #tpu.memory_space<vmem>>, vector<32x128xbf16>
    %cst_8 = arith.constant dense<0.000000e+00> : vector<128x128xf32>
    %11 = tpu.matmul %9, %10, %cst_8 {dimension_numbers = #tpu.dot_dimension_numbers<[1], [0], [0], [1], [0, 0, 1, 1], [], []>} : vector<128x32xbf16>, vector<32x128xbf16>, vector<128x128xf32> -> vector<128x128xf32>
    %c0_9 = arith.constant 0 : index
    %c0_10 = arith.constant 0 : index
    %12 = vector.load %arg5[%c0_9, %c0_10] : memref<1x128xf32, #tpu.memory_space<vmem>>, vector<1x128xf32>
    %13 = vector.broadcast %12 : vector<1x128xf32> to vector<128x128xf32>
    %14 = arith.addf %11, %13 : vector<128x128xf32>
    %cst_11 = arith.constant dense<0xFF800000> : vector<128xf32>
    %15 = vector.multi_reduction <maximumf>, %14, %cst_11 [1] : vector<128x128xf32> to vector<128xf32>
    %16 = vector.shape_cast %15 : vector<128xf32> to vector<128x1xf32>
    %17 = vector.broadcast %16 : vector<128x1xf32> to vector<128x128xf32>
    %18 = arith.subf %14, %17 : vector<128x128xf32>
    %19 = math.exp %18 : vector<128x128xf32>
    %cst_12 = arith.constant dense<0.000000e+00> : vector<128xf32>
    %20 = vector.multi_reduction <add>, %19, %cst_12 [1] : vector<128x128xf32> to vector<128xf32>
    %21 = vector.shape_cast %20 : vector<128xf32> to vector<128x1xf32>
    %22 = math.log %21 : vector<128x1xf32>
    %23 = arith.addf %16, %22 : vector<128x1xf32>
    %24 = vector.broadcast %23 : vector<128x1xf32> to vector<128x128xf32>
    %25 = arith.subf %14, %24 : vector<128x128xf32>
    %26 = tpu.transpose %25, [1, 0] : vector<128x128xf32> -> vector<128x128xf32>
    %27 = vector.extract_strided_slice %26 {offsets = [0, 0], sizes = [8, 128], strides = [1, 1]} : vector<128x128xf32> to vector<8x128xf32>
    %c0_13 = arith.constant 0 : index
    %c0_14 = arith.constant 0 : index
    %28 = vector.load %arg6[%c0_13, %c0_14] : memref<8x128xf32, #tpu.memory_space<vmem>>, vector<8x128xf32>
    tpu.vector_store %arg6[%c0_13, %c0_14], %27 {strides = array<i32>} : memref<8x128xf32, #tpu.memory_space<vmem>>, vector<8x128xf32>,
    return
  }
  func.func @transform_0(%arg0: i32) -> (i32, i32) {
    %c0_i32 = arith.constant 0 : i32
    %c0_i32_0 = arith.constant 0 : i32
    return %arg0, %c0_i32 : i32, i32
  }
  func.func @transform_1(%arg0: i32) -> (i32, i32) {
    %c0_i32 = arith.constant 0 : i32
    %c0_i32_0 = arith.constant 0 : i32
    %c0_i32_1 = arith.constant 0 : i32
    return %c0_i32, %c0_i32_0 : i32, i32
  }
  func.func @transform_2(%arg0: i32) -> (i32, i32) {
    %c0_i32 = arith.constant 0 : i32
    %c0_i32_0 = arith.constant 0 : i32
    %c0_i32_1 = arith.constant 0 : i32
    return %c0_i32, %c0_i32_0 : i32, i32
  }
  func.func @transform_3(%arg0: i32) -> (i32, i32) {
    %c0_i32 = arith.constant 0 : i32
    %c0_i32_0 = arith.constant 0 : i32
    %c0_i32_1 = arith.constant 0 : i32
    return %c0_i32, %c0_i32_0 : i32, i32
  }
  func.func @transform_4(%arg0: i32) -> (i32, i32) {
    %c0_i32 = arith.constant 0 : i32
    %c0_i32_0 = arith.constant 0 : i32
    %c0_i32_1 = arith.constant 0 : i32
    return %c0_i32, %c0_i32_0 : i32, i32
  }
  func.func @transform_5(%arg0: i32) -> (i32, i32) {
    %c0_i32 = arith.constant 0 : i32
    %c0_i32_0 = arith.constant 0 : i32
    return %c0_i32, %arg0 : i32, i32
  }
}

</mosaic_0001>

<llo_original>
// kernel: tpu_custom_call.1
$region0: #{tpu_custom_call.1}
  #allocation0 [shape = 'u32[]', space=smem, size = 0x4, offset = 0x4, fixed_abs, tag = 'smem constant byte address 0x4 - core index']
  #allocation1 [shape = 'u32[144,128]{1,0:T(1,128)}', space=vmem, size = 0x12000, scoped, tag = 'internal scratch']
  %s0 = inlined_call_operand.hbm [shape: f32[8,16], index: 0, kind: input, shape index: {}]
  %s1 = inlined_call_operand.hbm [shape: bf16[16,32], index: 1, kind: input, shape index: {}]
  %s2 = inlined_call_operand.vmem [shape: f32[1,32], index: 2, kind: input, shape index: {}]
  %s3 = inlined_call_operand.hbm [shape: bf16[32,128], index: 3, kind: input, shape index: {}]
  %s4 = inlined_call_operand.vmem [shape: f32[1,128], index: 4, kind: input, shape index: {}]
  %s5 = inlined_call_operand.hbm [shape: f32[8,128], index: 5, kind: output, shape index: {}]
  %s6 = sld [smem:[#allocation0]]
  $region42: #{tpu_custom_call.1} parent=0
    _
  %s8 = ssub.s32 1, %s6
  %s9 = scalar_select 0, %s8, %s6
  $region1: #{tpu_custom_call.1} parent=0
    #allocation2 [shape = 'u8[65536]{0}', space=vmem, size = 0x10000, scoped, tag = 'input window, operand 0, single buffered']
    #allocation3 [shape = 's32[1]{0}', space=sflag, size = 0x4, scoped, tag = 'scoped memory for tpu_custom_call.1']
    #allocation4 [shape = 's32[1]{0}', space=sflag, size = 0x4, scoped, tag = 'scoped memory for tpu_custom_call.1']
    #allocation5 [shape = 'u8[4096]{0}', space=vmem, size = 0x1000, scoped, tag = 'input window, operand 1, single buffered']
    #allocation6 [shape = 's32[1]{0}', space=sflag, size = 0x4, scoped, tag = 'scoped memory for tpu_custom_call.1']
    #allocation7 [shape = 'u8[8192]{0}', space=vmem, size = 0x2000, scoped, tag = 'input window, operand 3, single buffered']
    #allocation8 [shape = 'u8[4096]{0}', space=vmem, size = 0x1000, scoped, tag = 'output window, operand 0, single buffered']
    %10 = vsyncpa [#allocation3], 0
    %11 = vsyncpa [#allocation6], 0
    %12 = vsyncpa [#allocation4], 0
    // Predicated region
    $region2: #{tpu_custom_call.1} parent=1 // pred_check
      _
    $region3: #{tpu_custom_call.1} parent=1 // pred_check_branch
      %14 = sbr.rel (0) target = $region5
    $region4: #{tpu_custom_call.1} parent=1 // pred_region
      %s16 = ssub.s32 2048, 128
      %17 = vsyncadd [#allocation3], %s16
      %s18 = sshll.u32 [#allocation2], 4
      %s19 = int_to_ptr.vmem [resolvable:$true] %s18
      %24 = dma.hbm_to_vmem [thread:$0]  %s0, 128, %s19, [#allocation3], 128, 128, 8
    $region5: #{tpu_custom_call.1} parent=1 // pred_fallthru
      _
    // Predicated region
    $region6: #{tpu_custom_call.1} parent=1 // pred_check
      _
    $region7: #{tpu_custom_call.1} parent=1 // pred_check_branch
      %26 = sbr.rel (0) target = $region9
    $region8: #{tpu_custom_call.1} parent=1 // pred_region
      %s28 = ssub.s32 128, 128
      %29 = vsyncadd [#allocation6], %s28
      %s30 = sshll.u32 [#allocation5], 4
      %s31 = int_to_ptr.vmem [resolvable:$true] %s30
      %36 = dma.hbm_to_vmem [thread:$0]  %s1, 128, %s31, [#allocation6], 64, 64, 4
    $region9: #{tpu_custom_call.1} parent=1 // pred_fallthru
      _
    // Predicated region
    $region10: #{tpu_custom_call.1} parent=1 // pred_check
      _
    $region11: #{tpu_custom_call.1} parent=1 // pred_check_branch
      %38 = sbr.rel (0) target = $region13
    $region12: #{tpu_custom_call.1} parent=1 // pred_region
      _
    $region13: #{tpu_custom_call.1} parent=1 // pred_fallthru
      _
    // Predicated region
    $region14: #{tpu_custom_call.1} parent=1 // pred_check
      _
    $region15: #{tpu_custom_call.1} parent=1 // pred_check_branch
      %40 = sbr.rel (0) target = $region17
    $region16: #{tpu_custom_call.1} parent=1 // pred_region
      %s42 = ssub.s32 256, 256
      %43 = vsyncadd [#allocation6], %s42
      %s44 = sshll.u32 [#allocation7], 4
      %s45 = int_to_ptr.vmem [resolvable:$true] %s44
      %50 = dma.hbm_to_vmem [thread:$0]  %s3, 256, %s45, [#allocation6], 64, 64, 4
    $region17: #{tpu_custom_call.1} parent=1 // pred_fallthru
      _
    // Predicated region
    $region18: #{tpu_custom_call.1} parent=1 // pred_check
      _
    $region19: #{tpu_custom_call.1} parent=1 // pred_check_branch
      %52 = sbr.rel (0) target = $region21
    $region20: #{tpu_custom_call.1} parent=1 // pred_region
      _
    $region21: #{tpu_custom_call.1} parent=1 // pred_fallthru
      _
    // Predicated region
    $region22: #{tpu_custom_call.1} parent=1 // pred_check
      _
    $region23: #{tpu_custom_call.1} parent=1 // pred_check_branch
      %54 = sbr.rel (0) target = $region25
    $region24: #{tpu_custom_call.1} parent=1 // pred_region
      %55 = dma.done [#allocation3], 2048
    $region25: #{tpu_custom_call.1} parent=1 // pred_fallthru
      _
    // Predicated region
    $region26: #{tpu_custom_call.1} parent=1 // pred_check
      _
    $region27: #{tpu_custom_call.1} parent=1 // pred_check_branch
      %57 = sbr.rel (0) target = $region29
    $region28: #{tpu_custom_call.1} parent=1 // pred_region
      %58 = dma.done [#allocation6], 128
    $region29: #{tpu_custom_call.1} parent=1 // pred_fallthru
      _
    // Predicated region
    $region30: #{tpu_custom_call.1} parent=1 // pred_check
      _
    $region31: #{tpu_custom_call.1} parent=1 // pred_check_branch
      %60 = sbr.rel (0) target = $region33
    $region32: #{tpu_custom_call.1} parent=1 // pred_region
      %61 = dma.done [#allocation6], 256
    $region33: #{tpu_custom_call.1} parent=1 // pred_fallthru
      _
    %v63 = vld [vmem:[#allocation2] sm:$0xff]
    %v64 = vld [vmem:[#allocation2 + $0x8] sm:$0xff]
    %v65 = vld [vmem:[#allocation2 + $0x10] sm:$0xff]
    %v66 = vld [vmem:[#allocation2 + $0x18] sm:$0xff]
    %v67 = vld [vmem:[#allocation2 + $0x20] sm:$0xff]
    %v68 = vld [vmem:[#allocation2 + $0x28] sm:$0xff]
    %v69 = vld [vmem:[#allocation2 + $0x30] sm:$0xff]
    %v70 = vld [vmem:[#allocation2 + $0x38] sm:$0xff]
    %v71 = vld [vmem:[#allocation2 + $0x40] sm:$0xff]
    %v72 = vld [vmem:[#allocation2 + $0x48] sm:$0xff]
    %v73 = vld [vmem:[#allocation2 + $0x50] sm:$0xff]
    %v74 = vld [vmem:[#allocation2 + $0x58] sm:$0xff]
    %v75 = vld [vmem:[#allocation2 + $0x60] sm:$0xff]
    %v76 = vld [vmem:[#allocation2 + $0x68] sm:$0xff]
    %v77 = vld [vmem:[#allocation2 + $0x70] sm:$0xff]
    %v78 = vld [vmem:[#allocation2 + $0x78] sm:$0xff]
    %v79 = vpack.c.bf16 %v64, %v63
    %v80 = vpack.c.bf16 %v66, %v65
    %v81 = vpack.c.bf16 %v68, %v67
    %v82 = vpack.c.bf16 %v70, %v69
    %v83 = vpack.c.bf16 %v72, %v71
    %v84 = vpack.c.bf16 %v74, %v73
    %v85 = vpack.c.bf16 %v76, %v75
    %v86 = vpack.c.bf16 %v78, %v77
    %v87 = vld [vmem:[#allocation5] sm:$0xf]
    %v88 = vld [vmem:[#allocation5 + $0x4] sm:$0xf]
    %v89 = vld [vmem:[%s2] sm:$0x1]
    %v91 = vlaneseq
    %v92 = vshrl.u32 %v91, 7
    %v93 = vsub.s32 0, %v92
    %v94 = vrot.slane %v89, %v93
    %v98 = vunpack.c.l.b16 %v87
    %v99 = vunpack.c.l.b16 %v88
    %v100 = vpack.c.b16 %v99, %v98
    %vm102 = vcmask 130048
    %v104 = vsel %vm102, %v79, 0
    %v107 = vsel %vm102, %v80, 0
    %v110 = vsel %vm102, %v81, 0
    %v113 = vsel %vm102, %v82, 0
    %v116 = vsel %vm102, %v83, 0
    %v119 = vsel %vm102, %v84, 0
    %v122 = vsel %vm102, %v85, 0
    %v125 = vsel %vm102, %v86, 0
    %127 = vmatprep.subr.bf16.mxu0 0
    %128 = vmatpush1.bf16.msra.mxu0 %v100
    %129 = vmatprep.subr.bf16.mxu0 0
    %130 = vmatpush1.bf16.msra.mxu0 0
    %131 = vmatprep.subr.bf16.mxu0 0
    %132 = vmatpush1.bf16.msra.mxu0 0
    %133 = vmatprep.subr.bf16.mxu0 0
    %134 = vmatpush1.bf16.msra.mxu0 0
    %135 = vmatprep.subr.bf16.mxu0 0
    %136 = vmatpush1.bf16.msra.mxu0 0
    %137 = vmatprep.subr.bf16.mxu0 0
    %138 = vmatpush1.bf16.msra.mxu0 0
    %139 = vmatprep.subr.bf16.mxu0 0
    %140 = vmatpush1.bf16.msra.mxu0 0
    %141 = vmatprep.subr.bf16.mxu0 0
    %142 = vmatpush1.bf16.msra.mxu0 0
    %143 = vmatprep.subr.bf16.mxu0 0
    %144 = vmatpush1.bf16.msra.mxu0 0
    %145 = vmatprep.subr.bf16.mxu0 0
    %146 = vmatpush1.bf16.msra.mxu0 0
    %147 = vmatprep.subr.bf16.mxu0 0
    %148 = vmatpush1.bf16.msra.mxu0 0
    %149 = vmatprep.subr.bf16.mxu0 0
    %150 = vmatpush1.bf16.msra.mxu0 0
    %151 = vmatprep.subr.bf16.mxu0 0
    %152 = vmatpush1.bf16.msra.mxu0 0
    %153 = vmatprep.subr.bf16.mxu0 0
    %154 = vmatpush1.bf16.msra.mxu0 0
    %155 = vmatprep.subr.bf16.mxu0 0
    %156 = vmatpush1.bf16.msra.mxu0 0
    %157 = vmatprep.subr.bf16.mxu0 0
    %158 = vmatpush1.bf16.msra.mxu0 0
    %159 = vmatprep.mubr.bf16.mxu0 0
    %160 = vmatmul.mubr.bf16.gmra.mrb[0].mxu0 %v104
    %v161 = vpop.f32.mrb[0].mxu0
    %v162 = vadd.f32 %v94, %v161
    %v163 = vpop.f32.mrb[0].mxu0
    %v164 = vpop.f32.mrb[0].mxu0
    %v165 = vadd.f32 %v94, %v164
    %v166 = vpop.f32.mrb[0].mxu0
    %167 = vmatprep.mubr.bf16.mxu0 0
    %168 = vmatmul.mubr.bf16.gmra.mrb[0].mxu0 %v107
    %v169 = vpop.f32.mrb[0].mxu0
    %v170 = vadd.f32 %v94, %v169
    %v171 = vpop.f32.mrb[0].mxu0
    %v172 = vpop.f32.mrb[0].mxu0
    %v173 = vadd.f32 %v94, %v172
    %v174 = vpop.f32.mrb[0].mxu0
    %175 = vmatprep.mubr.bf16.mxu0 0
    %176 = vmatmul.mubr.bf16.gmra.mrb[0].mxu0 %v110
    %v177 = vpop.f32.mrb[0].mxu0
    %v178 = vadd.f32 %v94, %v177
    %v179 = vpop.f32.mrb[0].mxu0
    %v180 = vpop.f32.mrb[0].mxu0
    %v181 = vadd.f32 %v94, %v180
    %v182 = vpop.f32.mrb[0].mxu0
    %183 = vmatprep.mubr.bf16.mxu0 0
    %184 = vmatmul.mubr.bf16.gmra.mrb[0].mxu0 %v113
    %v185 = vpop.f32.mrb[0].mxu0
    %v186 = vadd.f32 %v94, %v185
    %v187 = vpop.f32.mrb[0].mxu0
    %v188 = vpop.f32.mrb[0].mxu0
    %v189 = vadd.f32 %v94, %v188
    %v190 = vpop.f32.mrb[0].mxu0
    %191 = vmatprep.mubr.bf16.mxu0 0
    %192 = vmatmul.mubr.bf16.gmra.mrb[0].mxu0 %v116
    %v193 = vpop.f32.mrb[0].mxu0
    %v194 = vadd.f32 %v94, %v193
    %v195 = vpop.f32.mrb[0].mxu0
    %v196 = vpop.f32.mrb[0].mxu0
    %v197 = vadd.f32 %v94, %v196
    %v198 = vpop.f32.mrb[0].mxu0
    %199 = vmatprep.mubr.bf16.mxu0 0
    %200 = vmatmul.mubr.bf16.gmra.mrb[0].mxu0 %v119
    %v201 = vpop.f32.mrb[0].mxu0
    %v202 = vadd.f32 %v94, %v201
    %v203 = vpop.f32.mrb[0].mxu0
    %v204 = vpop.f32.mrb[0].mxu0
    %v205 = vadd.f32 %v94, %v204
    %v206 = vpop.f32.mrb[0].mxu0
    %207 = vmatprep.mubr.bf16.mxu0 0
    %208 = vmatmul.mubr.bf16.gmra.mrb[0].mxu0 %v122
    %v209 = vpop.f32.mrb[0].mxu0
    %v210 = vadd.f32 %v94, %v209
    %v211 = vpop.f32.mrb[0].mxu0
    %v212 = vpop.f32.mrb[0].mxu0
    %v213 = vadd.f32 %v94, %v212
    %v214 = vpop.f32.mrb[0].mxu0
    %215 = vmatprep.mubr.bf16.mxu0 0
    %216 = vmatmul.mubr.bf16.gmra.mrb[0].mxu0 %v125
    %v217 = vpop.f32.mrb[0].mxu0
    %v218 = vadd.f32 %v94, %v217
    %v219 = vpop.f32.mrb[0].mxu0
    %v220 = vpop.f32.mrb[0].mxu0
    %v221 = vadd.f32 %v94, %v220
    %v222 = vpop.f32.mrb[0].mxu0
    %223 = vdwg.mxu0
    %v224 = vmax.f32 %v162, 0.0
    %v225 = vmax.f32 %v165, 0.0
    %v226 = vmax.f32 %v170, 0.0
    %v227 = vmax.f32 %v173, 0.0
    %v228 = vmax.f32 %v178, 0.0
    %v229 = vmax.f32 %v181, 0.0
    %v230 = vmax.f32 %v186, 0.0
    %v231 = vmax.f32 %v189, 0.0
    %v232 = vmax.f32 %v194, 0.0
    %v233 = vmax.f32 %v197, 0.0
    %v234 = vmax.f32 %v202, 0.0
    %v235 = vmax.f32 %v205, 0.0
    %v236 = vmax.f32 %v210, 0.0
    %v237 = vmax.f32 %v213, 0.0
    %v238 = vmax.f32 %v218, 0.0
    %v239 = vmax.f32 %v221, 0.0
    %v240 = vpack.c.bf16 %v225, %v224
    %v241 = vpack.c.bf16 %v227, %v226
    %v242 = vpack.c.bf16 %v229, %v228
    %v243 = vpack.c.bf16 %v231, %v230
    %v244 = vpack.c.bf16 %v233, %v232
    %v245 = vpack.c.bf16 %v235, %v234
    %v246 = vpack.c.bf16 %v237, %v236
    %v247 = vpack.c.bf16 %v239, %v238
    %v248 = vld [vmem:[#allocation7] sm:$0xf]
    %v249 = vld [vmem:[#allocation7 + $0x4] sm:$0xf]
    %v250 = vld [vmem:[#allocation7 + $0x8] sm:$0xf]
    %v251 = vld [vmem:[#allocation7 + $0xc] sm:$0xf]
    %v252 = vld [vmem:[%s4] sm:$0x1]
    %v254 = vlaneseq
    %v255 = vshrl.u32 %v254, 7
    %v256 = vsub.s32 0, %v255
    %v257 = vrot.slane %v252, %v256
    %v263 = vunpack.c.l.b16 %v248
    %v264 = vunpack.c.l.b16 %v249
    %v265 = vunpack.c.l.b16 %v250
    %v266 = vunpack.c.l.b16 %v251
    %v267 = vpack.c.b16 %v264, %v263
    %v268 = vpack.c.b16 %v266, %v265
    %vm271 = vcmask 261120
    %v273 = vsel %vm271, %v240, 0
    %v276 = vsel %vm271, %v241, 0
    %v279 = vsel %vm271, %v242, 0
    %v282 = vsel %vm271, %v243, 0
    %v285 = vsel %vm271, %v244, 0
    %v288 = vsel %vm271, %v245, 0
    %v291 = vsel %vm271, %v246, 0
    %v294 = vsel %vm271, %v247, 0
    %296 = vmatprep.subr.bf16.mxu0 0
    %297 = vmatpush1.bf16.msra.mxu0 %v267
    %298 = vmatprep.subr.bf16.mxu0 0
    %299 = vmatpush1.bf16.msra.mxu0 %v268
    %300 = vmatprep.subr.bf16.mxu0 0
    %301 = vmatpush1.bf16.msra.mxu0 0
    %302 = vmatprep.subr.bf16.mxu0 0
    %303 = vmatpush1.bf16.msra.mxu0 0
    %304 = vmatprep.subr.bf16.mxu0 0
    %305 = vmatpush1.bf16.msra.mxu0 0
    %306 = vmatprep.subr.bf16.mxu0 0
    %307 = vmatpush1.bf16.msra.mxu0 0
    %308 = vmatprep.subr.bf16.mxu0 0
    %309 = vmatpush1.bf16.msra.mxu0 0
    %310 = vmatprep.subr.bf16.mxu0 0
    %311 = vmatpush1.bf16.msra.mxu0 0
    %312 = vmatprep.subr.bf16.mxu0 0
    %313 = vmatpush1.bf16.msra.mxu0 0
    %314 = vmatprep.subr.bf16.mxu0 0
    %315 = vmatpush1.bf16.msra.mxu0 0
    %316 = vmatprep.subr.bf16.mxu0 0
    %317 = vmatpush1.bf16.msra.mxu0 0
    %318 = vmatprep.subr.bf16.mxu0 0
    %319 = vmatpush1.bf16.msra.mxu0 0
    %320 = vmatprep.subr.bf16.mxu0 0
    %321 = vmatpush1.bf16.msra.mxu0 0
    %322 = vmatprep.subr.bf16.mxu0 0
    %323 = vmatpush1.bf16.msra.mxu0 0
    %324 = vmatprep.subr.bf16.mxu0 0
    %325 = vmatpush1.bf16.msra.mxu0 0
    %326 = vmatprep.subr.bf16.mxu0 0
    %327 = vmatpush1.bf16.msra.mxu0 0
    %328 = vmatprep.mubr.bf16.mxu0 0
    %329 = vmatmul.mubr.bf16.gmra.mrb[0].mxu0 %v273
    %v330 = vpop.f32.mrb[0].mxu0
    %v331 = vadd.f32 %v257, %v330
    %v332 = vpop.f32.mrb[0].mxu0
    %v333 = vpop.f32.mrb[0].mxu0
    %v334 = vadd.f32 %v257, %v333
    %v335 = vpop.f32.mrb[0].mxu0
    %336 = vmatprep.mubr.bf16.mxu0 0
    %337 = vmatmul.mubr.bf16.gmra.mrb[0].mxu0 %v276
    %v338 = vpop.f32.mrb[0].mxu0
    %v339 = vadd.f32 %v257, %v338
    %v340 = vpop.f32.mrb[0].mxu0
    %v341 = vpop.f32.mrb[0].mxu0
    %v342 = vadd.f32 %v257, %v341
    %v343 = vpop.f32.mrb[0].mxu0
    %344 = vmatprep.mubr.bf16.mxu0 0
    %345 = vmatmul.mubr.bf16.gmra.mrb[0].mxu0 %v279
    %v346 = vpop.f32.mrb[0].mxu0
    %v347 = vadd.f32 %v257, %v346
    %v348 = vpop.f32.mrb[0].mxu0
    %v349 = vpop.f32.mrb[0].mxu0
    %v350 = vadd.f32 %v257, %v349
    %v351 = vpop.f32.mrb[0].mxu0
    %352 = vmatprep.mubr.bf16.mxu0 0
    %353 = vmatmul.mubr.bf16.gmra.mrb[0].mxu0 %v282
    %v354 = vpop.f32.mrb[0].mxu0
    %v355 = vadd.f32 %v257, %v354
    %v356 = vpop.f32.mrb[0].mxu0
    %v357 = vpop.f32.mrb[0].mxu0
    %v358 = vadd.f32 %v257, %v357
    %v359 = vpop.f32.mrb[0].mxu0
    %360 = vmatprep.mubr.bf16.mxu0 0
    %361 = vmatmul.mubr.bf16.gmra.mrb[0].mxu0 %v285
    %v362 = vpop.f32.mrb[0].mxu0
    %v363 = vadd.f32 %v257, %v362
    %v364 = vpop.f32.mrb[0].mxu0
    %v365 = vpop.f32.mrb[0].mxu0
    %v366 = vadd.f32 %v257, %v365
    %v367 = vpop.f32.mrb[0].mxu0
    %368 = vmatprep.mubr.bf16.mxu0 0
    %369 = vmatmul.mubr.bf16.gmra.mrb[0].mxu0 %v288
    %v370 = vpop.f32.mrb[0].mxu0
    %v371 = vadd.f32 %v257, %v370
    %v372 = vpop.f32.mrb[0].mxu0
    %v373 = vpop.f32.mrb[0].mxu0
    %v374 = vadd.f32 %v257, %v373
    %v375 = vpop.f32.mrb[0].mxu0
    %376 = vmatprep.mubr.bf16.mxu0 0
    %377 = vmatmul.mubr.bf16.gmra.mrb[0].mxu0 %v291
    %v378 = vpop.f32.mrb[0].mxu0
    %v379 = vadd.f32 %v257, %v378
    %v380 = vpop.f32.mrb[0].mxu0
    %v381 = vpop.f32.mrb[0].mxu0
    %v382 = vadd.f32 %v257, %v381
    %v383 = vpop.f32.mrb[0].mxu0
    %384 = vmatprep.mubr.bf16.mxu0 0
    %385 = vmatmul.mubr.bf16.gmra.mrb[0].mxu0 %v294
    %v386 = vpop.f32.mrb[0].mxu0
    %v387 = vadd.f32 %v257, %v386
    %v388 = vpop.f32.mrb[0].mxu0
    %v389 = vpop.f32.mrb[0].mxu0
    %v390 = vadd.f32 %v257, %v389
    %v391 = vpop.f32.mrb[0].mxu0
    %392 = vdwg.mxu0
    %393 = vmax.xlane.f32.xlu0 %v331
    %v394 = vpop.xlane.xlu0 %393
    %395 = vmax.xlane.f32.xlu0 %v334
    %v396 = vpop.xlane.xlu0 %395
    %397 = vmax.xlane.f32.xlu0 %v339
    %v398 = vpop.xlane.xlu0 %397
    %399 = vmax.xlane.f32.xlu0 %v342
    %v400 = vpop.xlane.xlu0 %399
    %401 = vmax.xlane.f32.xlu0 %v347
    %v402 = vpop.xlane.xlu0 %401
    %403 = vmax.xlane.f32.xlu0 %v350
    %v404 = vpop.xlane.xlu0 %403
    %405 = vmax.xlane.f32.xlu0 %v355
    %v406 = vpop.xlane.xlu0 %405
    %407 = vmax.xlane.f32.xlu0 %v358
    %v408 = vpop.xlane.xlu0 %407
    %409 = vmax.xlane.f32.xlu0 %v363
    %v410 = vpop.xlane.xlu0 %409
    %411 = vmax.xlane.f32.xlu0 %v366
    %v412 = vpop.xlane.xlu0 %411
    %413 = vmax.xlane.f32.xlu0 %v371
    %v414 = vpop.xlane.xlu0 %413
    %415 = vmax.xlane.f32.xlu0 %v374
    %v416 = vpop.xlane.xlu0 %415
    %417 = vmax.xlane.f32.xlu0 %v379
    %v418 = vpop.xlane.xlu0 %417
    %419 = vmax.xlane.f32.xlu0 %v382
    %v420 = vpop.xlane.xlu0 %419
    %421 = vmax.xlane.f32.xlu0 %v387
    %v422 = vpop.xlane.xlu0 %421
    %423 = vmax.xlane.f32.xlu0 %v390
    %v424 = vpop.xlane.xlu0 %423
    %v425 = vsub.f32 %v331, %v394
    %v426 = vsub.f32 %v334, %v396
    %v427 = vsub.f32 %v339, %v398
    %v428 = vsub.f32 %v342, %v400
    %v429 = vsub.f32 %v347, %v402
    %v430 = vsub.f32 %v350, %v404
    %v431 = vsub.f32 %v355, %v406
    %v432 = vsub.f32 %v358, %v408
    %v433 = vsub.f32 %v363, %v410
    %v434 = vsub.f32 %v366, %v412
    %v435 = vsub.f32 %v371, %v414
    %v436 = vsub.f32 %v374, %v416
    %v437 = vsub.f32 %v379, %v418
    %v438 = vsub.f32 %v382, %v420
    %v439 = vsub.f32 %v387, %v422
    %v440 = vsub.f32 %v390, %v424
    %v441 = vmul.f32 %v425, 1.442695
    %v442 = vpow.pop %v441
    %v443 = vmul.f32 %v426, 1.442695
    %v444 = vpow.pop %v443
    %v445 = vmul.f32 %v427, 1.442695
    %v446 = vpow.pop %v445
    %v447 = vmul.f32 %v428, 1.442695
    %v448 = vpow.pop %v447
    %v449 = vmul.f32 %v429, 1.442695
    %v450 = vpow.pop %v449
    %v451 = vmul.f32 %v430, 1.442695
    %v452 = vpow.pop %v451
    %v453 = vmul.f32 %v431, 1.442695
    %v454 = vpow.pop %v453
    %v455 = vmul.f32 %v432, 1.442695
    %v456 = vpow.pop %v455
    %v457 = vmul.f32 %v433, 1.442695
    %v458 = vpow.pop %v457
    %v459 = vmul.f32 %v434, 1.442695
    %v460 = vpow.pop %v459
    %v461 = vmul.f32 %v435, 1.442695
    %v462 = vpow.pop %v461
    %v463 = vmul.f32 %v436, 1.442695
    %v464 = vpow.pop %v463
    %v465 = vmul.f32 %v437, 1.442695
    %v466 = vpow.pop %v465
    %v467 = vmul.f32 %v438, 1.442695
    %v468 = vpow.pop %v467
    %v469 = vmul.f32 %v439, 1.442695
    %v470 = vpow.pop %v469
    %v471 = vmul.f32 %v440, 1.442695
    %v472 = vpow.pop %v471
    %473 = vadd.xlane.f32.xlu0 %v442
    %v474 = vpop.xlane.xlu0 %473
    %475 = vadd.xlane.f32.xlu0 %v444
    %v476 = vpop.xlane.xlu0 %475
    %477 = vadd.xlane.f32.xlu0 %v446
    %v478 = vpop.xlane.xlu0 %477
    %479 = vadd.xlane.f32.xlu0 %v448
    %v480 = vpop.xlane.xlu0 %479
    %481 = vadd.xlane.f32.xlu0 %v450
    %v482 = vpop.xlane.xlu0 %481
    %483 = vadd.xlane.f32.xlu0 %v452
    %v484 = vpop.xlane.xlu0 %483
    %485 = vadd.xlane.f32.xlu0 %v454
    %v486 = vpop.xlane.xlu0 %485
    %487 = vadd.xlane.f32.xlu0 %v456
    %v488 = vpop.xlane.xlu0 %487
    %489 = vadd.xlane.f32.xlu0 %v458
    %v490 = vpop.xlane.xlu0 %489
    %491 = vadd.xlane.f32.xlu0 %v460
    %v492 = vpop.xlane.xlu0 %491
    %493 = vadd.xlane.f32.xlu0 %v462
    %v494 = vpop.xlane.xlu0 %493
    %495 = vadd.xlane.f32.xlu0 %v464
    %v496 = vpop.xlane.xlu0 %495
    %497 = vadd.xlane.f32.xlu0 %v466
    %v498 = vpop.xlane.xlu0 %497
    %499 = vadd.xlane.f32.xlu0 %v468
    %v500 = vpop.xlane.xlu0 %499
    %501 = vadd.xlane.f32.xlu0 %v470
    %v502 = vpop.xlane.xlu0 %501
    %503 = vadd.xlane.f32.xlu0 %v472
    %v504 = vpop.xlane.xlu0 %503
    %v505 = vlog2.pop %v474
    %v506 = vmul.f32 %v505, 0.6931472
    %v507 = vlog2.pop %v476
    %v508 = vmul.f32 %v507, 0.6931472
    %v509 = vlog2.pop %v478
    %v510 = vmul.f32 %v509, 0.6931472
    %v511 = vlog2.pop %v480
    %v512 = vmul.f32 %v511, 0.6931472
    %v513 = vlog2.pop %v482
    %v514 = vmul.f32 %v513, 0.6931472
    %v515 = vlog2.pop %v484
    %v516 = vmul.f32 %v515, 0.6931472
    %v517 = vlog2.pop %v486
    %v518 = vmul.f32 %v517, 0.6931472
    %v519 = vlog2.pop %v488
    %v520 = vmul.f32 %v519, 0.6931472
    %v521 = vlog2.pop %v490
    %v522 = vmul.f32 %v521, 0.6931472
    %v523 = vlog2.pop %v492
    %v524 = vmul.f32 %v523, 0.6931472
    %v525 = vlog2.pop %v494
    %v526 = vmul.f32 %v525, 0.6931472
    %v527 = vlog2.pop %v496
    %v528 = vmul.f32 %v527, 0.6931472
    %v529 = vlog2.pop %v498
    %v530 = vmul.f32 %v529, 0.6931472
    %v531 = vlog2.pop %v500
    %v532 = vmul.f32 %v531, 0.6931472
    %v533 = vlog2.pop %v502
    %v534 = vmul.f32 %v533, 0.6931472
    %v535 = vlog2.pop %v504
    %v536 = vmul.f32 %v535, 0.6931472
    %v537 = vadd.f32 %v394, %v506
    %v538 = vadd.f32 %v396, %v508
    %v539 = vadd.f32 %v398, %v510
    %v540 = vadd.f32 %v400, %v512
    %v541 = vadd.f32 %v402, %v514
    %v542 = vadd.f32 %v404, %v516
    %v543 = vadd.f32 %v406, %v518
    %v544 = vadd.f32 %v408, %v520
    %v545 = vadd.f32 %v410, %v522
    %v546 = vadd.f32 %v412, %v524
    %v547 = vadd.f32 %v414, %v526
    %v548 = vadd.f32 %v416, %v528
    %v549 = vadd.f32 %v418, %v530
    %v550 = vadd.f32 %v420, %v532
    %v551 = vadd.f32 %v422, %v534
    %v552 = vadd.f32 %v424, %v536
    %v553 = vsub.f32 %v331, %v537
    %v554 = vsub.f32 %v334, %v538
    %v555 = vsub.f32 %v339, %v539
    %v556 = vsub.f32 %v342, %v540
    %v557 = vsub.f32 %v347, %v541
    %v558 = vsub.f32 %v350, %v542
    %v559 = vsub.f32 %v355, %v543
    %v560 = vsub.f32 %v358, %v544
    %v561 = vsub.f32 %v363, %v545
    %v562 = vsub.f32 %v366, %v546
    %v563 = vsub.f32 %v371, %v547
    %v564 = vsub.f32 %v374, %v548
    %v565 = vsub.f32 %v379, %v549
    %v566 = vsub.f32 %v382, %v550
    %v567 = vsub.f32 %v387, %v551
    %v568 = vsub.f32 %v390, %v552
    %569 = vxpose.xlu0.b32.start [1/16] %v553, 128
    %570 = vxpose.xlu0.b32.cont [2/16] %v554, 128
    %571 = vxpose.xlu0.b32.cont [3/16] %v555, 128
    %572 = vxpose.xlu0.b32.cont [4/16] %v556, 128
    %573 = vxpose.xlu0.b32.cont [5/16] %v557, 128
    %574 = vxpose.xlu0.b32.cont [6/16] %v558, 128
    %575 = vxpose.xlu0.b32.cont [7/16] %v559, 128
    %576 = vxpose.xlu0.b32.cont [8/16] %v560, 128
    %577 = vxpose.xlu0.b32.cont [9/16] %v561, 128
    %578 = vxpose.xlu0.b32.cont [10/16] %v562, 128
    %579 = vxpose.xlu0.b32.cont [11/16] %v563, 128
    %580 = vxpose.xlu0.b32.cont [12/16] %v564, 128
    %581 = vxpose.xlu0.b32.cont [13/16] %v565, 128
    %582 = vxpose.xlu0.b32.cont [14/16] %v566, 128
    %583 = vxpose.xlu0.b32.cont [15/16] %v567, 128
    %584 = vxpose.xlu0.b32.end [16/16] %v568, 128
    %v585 = vpop.trf.xlu0
    %v586 = vpop.trf.xlu0
    %v587 = vpop.trf.xlu0
    %v588 = vpop.trf.xlu0
    %v589 = vpop.trf.xlu0
    %v590 = vpop.trf.xlu0
    %v591 = vpop.trf.xlu0
    %v592 = vpop.trf.xlu0
    %v593 = vpop.trf.xlu0
    %v594 = vpop.trf.xlu0
    %v595 = vpop.trf.xlu0
    %v596 = vpop.trf.xlu0
    %v597 = vpop.trf.xlu0
    %v598 = vpop.trf.xlu0
    %v599 = vpop.trf.xlu0
    %v600 = vpop.trf.xlu0
    %601 = vst [vmem:[#allocation8] sm:$0xff] %v585
    // Predicated region
    $region34: #{tpu_custom_call.1} parent=1 // pred_check
      _
    $region35: #{tpu_custom_call.1} parent=1 // pred_check_branch
      %603 = sbr.rel (0) target = $region37
    $region36: #{tpu_custom_call.1} parent=1 // pred_region
      %s605 = ssub.s32 128, 128
      %606 = vsyncadd [#allocation4], %s605
      %s608 = sshll.u32 [#allocation8], 4
      %s609 = int_to_ptr.vmem [resolvable:$true] %s608
      %611 = dma.vmem_to_hbm [thread:$0]  %s609, 128, %s5, [#allocation4]
    $region37: #{tpu_custom_call.1} parent=1 // pred_fallthru
      _
    // Predicated region
    $region38: #{tpu_custom_call.1} parent=1 // pred_check
      _
    $region39: #{tpu_custom_call.1} parent=1 // pred_check_branch
      %613 = sbr.rel (0) target = $region41
    $region40: #{tpu_custom_call.1} parent=1 // pred_region
      %614 = dma.done [#allocation4], 128
    $region41: #{tpu_custom_call.1} parent=1 // pred_fallthru
      _
    %615 = vsyncpa [#allocation3], 1
    %616 = vsyncpa [#allocation6], 1
    %617 = vsyncpa [#allocation4], 1

</llo_original>
